<compile_context>
chip_gen: v5e
topology: v5e:2x2
jax: 0.10.0
libtpu: 0.0.40
codegen_flags: <defaults>
</compile_context>

<pallas_src>
import functools

import numpy as np
import jax
import jax.numpy as jnp
from jax.experimental import pallas as pl
from jax.experimental.pallas import tpu as pltpu

_LANES = 128   # cameras on the lane axis (supports up to 128 cameras per vreg)
_QROWS = 8     # rows of the per-call quaternion operand (rows 0:4 used)
_CANON = 0     # slab rows  0: 9  canonical rotation (row-major), identity if unannotated
_RELGT = 16    # slab rows 16:25  cams_rel_gt[p] (row-major), zero-padded
_MASKS = 32    # slab row  32 annotated mask, row 33 pairwise mask (1 for p < N-1)
_ROWS = 40     # slab sublane rows (8-aligned groups, multiple of 8)
_PI = float(np.pi)


# ----------------------------------------------------------------------------
# Pallas kernel
# ----------------------------------------------------------------------------
def _acos_poly(x):
    """acos on (-1, 1) via Abramowitz & Stegun 4.4.46 (|err| <= 2e-8).

    Uses only abs/mul/add/sqrt/select so it lowers to VPU + EUP with no
    dependence on an atan2 lowering path.
    """
    ax = jnp.abs(x)
    p = jnp.float32(-0.0012624911)
    p = p * ax + 0.0066700901
    p = p * ax - 0.0170881256
    p = p * ax + 0.0308918810
    p = p * ax - 0.0501743046
    p = p * ax + 0.0889789874
    p = p * ax - 0.2145988016
    p = p * ax + 1.5707963050
    r = jnp.sqrt(1.0 - ax) * p
    return jnp.where(x < 0.0, _PI - r, r)


def _canonical_reg_kernel(quat_ref, slab_ref, loss_ref, *, w_unary, w_pair):
    eps = 1e-4

    # ---- quaternion -> rotation for all cameras at once (pytorch3d, (w,x,y,z)) ----
    r = quat_ref[0:1, :]
    i = quat_ref[1:2, :]
    j = quat_ref[2:3, :]
    k = quat_ref[3:4, :]
    nrm = jnp.maximum(r * r + i * i + j * j + k * k, 1e-12)   # NaN-proof padding guard
    inv = pl.reciprocal(nrm, approx=True)
    inv = inv * (2.0 - nrm * inv)          # one Newton step -> ~f32-exact 1/nrm
    two_s = 2.0 * inv
    r_cur = [                              # R[p] at lane p, 9 row-major (1, L) rows
        1.0 - two_s * (j * j + k * k),
        two_s * (i * j - k * r),
        two_s * (i * k + j * r),
        two_s * (i * j + k * r),
        1.0 - two_s * (i * i + k * k),
        two_s * (j * k - i * r),
        two_s * (i * k - j * r),
        two_s * (j * k + i * r),
        1.0 - two_s * (i * i + j * j),
    ]
    # R[p+1] at lane p: rotate each rotation row left by one lane (wrap lanes masked).
    r_nxt = [pltpu.roll(m, shift=_LANES - 1, axis=1) for m in r_cur]

    # ---- unary: trace(R_pred @ R_canon^T) = <R_pred, R_canon>_F ----
    tr_u = r_cur[0] * slab_ref[_CANON:_CANON + 1, :]
    for c in range(1, 9):
        tr_u = tr_u + r_cur[c] * slab_ref[_CANON + c:_CANON + c + 1, :]

    # ---- pairwise: rel = R[p+1] @ R[p]^T ; trace(rel @ relgt^T) ----
    tr_p = None
    for ii in range(3):
        for jj in range(3):
            rel_ij = (r_nxt[3 * ii + 0] * r_cur[3 * jj + 0]
                      + r_nxt[3 * ii + 1] * r_cur[3 * jj + 1]
                      + r_nxt[3 * ii + 2] * r_cur[3 * jj + 2])
            term = rel_ij * slab_ref[_RELGT + 3 * ii + jj:_RELGT + 3 * ii + jj + 1, :]
            tr_p = term if tr_p is None else tr_p + term

    # ---- shared clamp/acos path + single masked lane-reduction ----
    tr = jnp.concatenate([tr_u, tr_p], axis=0)                # (2, L)
    mask = slab_ref[_MASKS:_MASKS + 2, :]                     # (2, L)
    cos = jnp.clip((tr - 1.0) * 0.5, -1.0 + eps, 1.0 - eps)
    ang = _acos_poly(cos)
    sums = jnp.sum(ang * mask, axis=1, keepdims=True)         # (2, 1)

    # weights already include 1/num_annotated and 1/(N-1) (means folded host-side)
    loss_ref[...] = w_unary * sums[0:1, :] + w_pair * sums[1:2, :]


# ----------------------------------------------------------------------------
# Setup-time constants + per-call wrapper (factory)
# ----------------------------------------------------------------------------
def build_canonical_reg_constants(cams_canonical, cams_rel_gt, annotated_idx, num_cams):
    """Precompute the static (40, 128) slab once."""
    n = num_cams
    ann = jnp.asarray(annotated_idx)
    slab = jnp.zeros((_ROWS, _LANES), dtype=jnp.float32)
    # canonical rotations: identity for unannotated cameras, zeros on padded lanes (masked)
    canon = jnp.tile(jnp.eye(3, dtype=jnp.float32)[None], (n, 1, 1))
    canon = canon.at[ann].set(cams_canonical[ann, :3, :3].astype(jnp.float32))
    slab = slab.at[_CANON:_CANON + 9, :n].set(canon.reshape(n, 9).T)
    # GT relative rotations (N-1 of them), zero-padded beyond lane N-2 (masked)
    relgt = cams_rel_gt[:, :3, :3].reshape(n - 1, 9).astype(jnp.float32)
    slab = slab.at[_RELGT:_RELGT + 9, :n - 1].set(relgt.T)
    # masks
    slab = slab.at[_MASKS, ann].set(1.0)
    slab = slab.at[_MASKS + 1, :n - 1].set(1.0)
    return slab


def make_canonical_registration_loss(cams_canonical, cams_rel_gt, annotated_idx,
                                     num_cams, unary_wt=1.0, pairwise_wt=1.0):
    n = int(num_cams)
    n_ann = int(len(annotated_idx))
    assert 2 <= n <= _LANES, "kernel supports 2..128 cameras on the lane axis"
    assert n_ann >= 1, "need at least one annotated camera"

    slab = build_canonical_reg_constants(cams_canonical, cams_rel_gt, annotated_idx, n)
    # identity-quaternion padding so unused lanes stay well-conditioned
    quat_base = jnp.zeros((_QROWS, _LANES), dtype=jnp.float32).at[0, :].set(1.0)

    kernel = functools.partial(_canonical_reg_kernel,
                               w_unary=float(unary_wt) / n_ann,
                               w_pair=float(pairwise_wt) / (n - 1))
    call = pl.pallas_call(
        kernel,
        out_shape=jax.ShapeDtypeStruct((1, 1), jnp.float32),
        in_specs=[
            pl.BlockSpec(memory_space=pltpu.MemorySpace.VMEM),   # quat operand (8, 128)
            pl.BlockSpec(memory_space=pltpu.MemorySpace.VMEM),   # constant slab (40, 128)
        ],
        out_specs=pl.BlockSpec(memory_space=pltpu.MemorySpace.VMEM),
    )

    @jax.jit
    def loss_fn(quat):
        # `trans` (the SE(3) translation from get_vals) never affects the loss.
        q = quat.astype(jnp.float32).T                 # (4, n) component-major
        quat_in = quat_base.at[0:4, :n].set(q)         # 4 KiB operand; slab untouched
        return call(quat_in, slab)[0, 0]

    return loss_fn


# ----------------------------------------------------------------------------
# Pure-JAX helpers for setup + reference
# ----------------------------------------------------------------------------
def quat_to_matrix(q):
    r, i, j, k = q[:, 0], q[:, 1], q[:, 2], q[:, 3]
    two_s = 2.0 / jnp.sum(q * q, axis=-1)
    m = jnp.stack([
        1 - two_s * (j * j + k * k), two_s * (i * j - k * r), two_s * (i * k + j * r),
        two_s * (i * j + k * r), 1 - two_s * (i * i + k * k), two_s * (j * k - i * r),
        two_s * (i * k - j * r), two_s * (j * k + i * r), 1 - two_s * (i * i + j * j),
    ], axis=-1)
    return m.reshape(q.shape[0], 3, 3)


def reference_loss(quat, cams_canonical, cams_rel_gt, annotated_idx,
                   unary_wt=1.0, pairwise_wt=1.0):
    eps = 1e-4

    def rot_angle(m):
        cos = (m[..., 0, 0] + m[..., 1, 1] + m[..., 2, 2] - 1.0) / 2.0
        cos = jnp.clip(cos, -1.0 + eps, 1.0 - eps)
        return jnp.arccos(cos)

    R = quat_to_matrix(quat)
    lu = rot_angle(jnp.einsum('nij,nkj->nik',
                              R[annotated_idx],
                              cams_canonical[annotated_idx, :3, :3]))
    rel = jnp.einsum('nij,nkj->nik', R[1:], R[:-1])
    lp = rot_angle(jnp.einsum('nij,nkj->nik', rel, cams_rel_gt[:, :3, :3]))
    return unary_wt * lu.mean() + pairwise_wt * lp.mean()


# ----------------------------------------------------------------------------
if __name__ == "__main__":
    key = jax.random.PRNGKey(0)
    N = 8                                          # number of cameras (cams_view1)
    annotated_idx = np.array([0, 3, 6], dtype=np.int32)
    k1, k2, k3, k4 = jax.random.split(key, 4)

    def rand_se3(k, n):
        kq, kt = jax.random.split(k)
        q = jax.random.normal(kq, (n, 4), dtype=jnp.float32)
        q = q / jnp.linalg.norm(q, axis=1, keepdims=True)
        R = quat_to_matrix(q)
        t = jax.random.normal(kt, (n, 3), dtype=jnp.float32)
        se3 = jnp.tile(jnp.eye(4, dtype=jnp.float32)[None], (n, 1, 1))
        return se3.at[:, :3, :3].set(R).at[:, :3, 3].set(t)

    # __init__ equivalents (deterministic, in-script):
    cams_view1 = rand_se3(k1, N)
    cams_ann = rand_se3(k2, len(annotated_idx))                    # cams_canonical_dict values
    cams_canonical = jnp.tile(jnp.eye(4, dtype=jnp.float32)[None], (N, 1, 1))
    cams_canonical = cams_canonical.at[annotated_idx].set(cams_ann)
    cams_rel_gt = jnp.einsum('nij,nkj->nik',
                             cams_view1[1:, :3, :3], cams_view1[:-1, :3, :3])

    # TODO(synk): CameraMLP is not defined in the source module; its get_vals() output
    # (per-camera quaternion + translation) is synthesized deterministically here.
    quat = jax.random.normal(k3, (N, 4), dtype=jnp.float32)
    quat = quat / jnp.linalg.norm(quat, axis=1, keepdims=True)
    trans = jax.random.normal(k4, (N, 3), dtype=jnp.float32)       # unused by the loss

    loss_fn = make_canonical_registration_loss(cams_canonical, cams_rel_gt,
                                               annotated_idx, N,
                                               unary_wt=1.0, pairwise_wt=1.0)
    loss = jax.block_until_ready(loss_fn(quat))

    ref = reference_loss(quat, cams_canonical, cams_rel_gt, annotated_idx, 1.0, 1.0)
    np.testing.assert_allclose(np.asarray(loss), np.asarray(ref), rtol=1e-3, atol=1e-3)
    print("KERNEL_OK")
</pallas_src>

<mosaic_0001>
module attributes {stable_mosaic.version = 11 : i64} {
  func.func @_canonical_reg_kernel(%arg0: memref<8x128xf32, #tpu.memory_space<vmem>>, %arg1: memref<40x128xf32, #tpu.memory_space<vmem>>, %arg2: memref<1x1xf32, #tpu.memory_space<vmem>>) attributes {dimension_semantics = [], scalar_prefetch = 0 : i64, scratch_operands = 0 : i64, tpu.core_type = #tpu.core_type<tc>} {
    %c0 = arith.constant 0 : index
    %c0_0 = arith.constant 0 : index
    %0 = vector.load %arg0[%c0, %c0_0] : memref<8x128xf32, #tpu.memory_space<vmem>>, vector<1x128xf32>
    %c1 = arith.constant 1 : index
    %c0_1 = arith.constant 0 : index
    %1 = vector.load %arg0[%c1, %c0_1] : memref<8x128xf32, #tpu.memory_space<vmem>>, vector<1x128xf32>
    %c2 = arith.constant 2 : index
    %c0_2 = arith.constant 0 : index
    %2 = vector.load %arg0[%c2, %c0_2] : memref<8x128xf32, #tpu.memory_space<vmem>>, vector<1x128xf32>
    %c3 = arith.constant 3 : index
    %c0_3 = arith.constant 0 : index
    %3 = vector.load %arg0[%c3, %c0_3] : memref<8x128xf32, #tpu.memory_space<vmem>>, vector<1x128xf32>
    %4 = arith.mulf %0, %0 : vector<1x128xf32>
    %5 = arith.mulf %1, %1 : vector<1x128xf32>
    %6 = arith.addf %4, %5 : vector<1x128xf32>
    %7 = arith.mulf %2, %2 : vector<1x128xf32>
    %8 = arith.addf %6, %7 : vector<1x128xf32>
    %9 = arith.mulf %3, %3 : vector<1x128xf32>
    %10 = arith.addf %8, %9 : vector<1x128xf32>
    %cst = arith.constant 9.99999996E-13 : f32
    %11 = vector.broadcast %cst : f32 to vector<1x128xf32>
    %12 = arith.maximumf %10, %11 : vector<1x128xf32>
    %13 = tpu.reciprocal %12 {approx = true} : vector<1x128xf32> -> vector<1x128xf32>
    %14 = arith.mulf %12, %13 : vector<1x128xf32>
    %cst_4 = arith.constant 2.000000e+00 : f32
    %15 = vector.broadcast %cst_4 : f32 to vector<1x128xf32>
    %16 = arith.subf %15, %14 : vector<1x128xf32>
    %17 = arith.mulf %13, %16 : vector<1x128xf32>
    %cst_5 = arith.constant 2.000000e+00 : f32
    %18 = vector.broadcast %cst_5 : f32 to vector<1x128xf32>
    %19 = arith.mulf %18, %17 : vector<1x128xf32>
    %20 = arith.mulf %2, %2 : vector<1x128xf32>
    %21 = arith.mulf %3, %3 : vector<1x128xf32>
    %22 = arith.addf %20, %21 : vector<1x128xf32>
    %23 = arith.mulf %19, %22 : vector<1x128xf32>
    %cst_6 = arith.constant 1.000000e+00 : f32
    %24 = vector.broadcast %cst_6 : f32 to vector<1x128xf32>
    %25 = arith.subf %24, %23 : vector<1x128xf32>
    %26 = arith.mulf %1, %2 : vector<1x128xf32>
    %27 = arith.mulf %3, %0 : vector<1x128xf32>
    %28 = arith.subf %26, %27 : vector<1x128xf32>
    %29 = arith.mulf %19, %28 : vector<1x128xf32>
    %30 = arith.mulf %1, %3 : vector<1x128xf32>
    %31 = arith.mulf %2, %0 : vector<1x128xf32>
    %32 = arith.addf %30, %31 : vector<1x128xf32>
    %33 = arith.mulf %19, %32 : vector<1x128xf32>
    %34 = arith.mulf %1, %2 : vector<1x128xf32>
    %35 = arith.mulf %3, %0 : vector<1x128xf32>
    %36 = arith.addf %34, %35 : vector<1x128xf32>
    %37 = arith.mulf %19, %36 : vector<1x128xf32>
    %38 = arith.mulf %1, %1 : vector<1x128xf32>
    %39 = arith.mulf %3, %3 : vector<1x128xf32>
    %40 = arith.addf %38, %39 : vector<1x128xf32>
    %41 = arith.mulf %19, %40 : vector<1x128xf32>
    %cst_7 = arith.constant 1.000000e+00 : f32
    %42 = vector.broadcast %cst_7 : f32 to vector<1x128xf32>
    %43 = arith.subf %42, %41 : vector<1x128xf32>
    %44 = arith.mulf %2, %3 : vector<1x128xf32>
    %45 = arith.mulf %1, %0 : vector<1x128xf32>
    %46 = arith.subf %44, %45 : vector<1x128xf32>
    %47 = arith.mulf %19, %46 : vector<1x128xf32>
    %48 = arith.mulf %1, %3 : vector<1x128xf32>
    %49 = arith.mulf %2, %0 : vector<1x128xf32>
    %50 = arith.subf %48, %49 : vector<1x128xf32>
    %51 = arith.mulf %19, %50 : vector<1x128xf32>
    %52 = arith.mulf %2, %3 : vector<1x128xf32>
    %53 = arith.mulf %1, %0 : vector<1x128xf32>
    %54 = arith.addf %52, %53 : vector<1x128xf32>
    %55 = arith.mulf %19, %54 : vector<1x128xf32>
    %56 = arith.mulf %1, %1 : vector<1x128xf32>
    %57 = arith.mulf %2, %2 : vector<1x128xf32>
    %58 = arith.addf %56, %57 : vector<1x128xf32>
    %59 = arith.mulf %19, %58 : vector<1x128xf32>
    %cst_8 = arith.constant 1.000000e+00 : f32
    %60 = vector.broadcast %cst_8 : f32 to vector<1x128xf32>
    %61 = arith.subf %60, %59 : vector<1x128xf32>
    %c127_i32 = arith.constant 127 : i32
    %62 = tpu.dynamic_rotate %25 by %c127_i32 dim 1 : vector<1x128xf32>, i32 -> vector<1x128xf32>
    %c127_i32_9 = arith.constant 127 : i32
    %63 = tpu.dynamic_rotate %29 by %c127_i32_9 dim 1 : vector<1x128xf32>, i32 -> vector<1x128xf32>
    %c127_i32_10 = arith.constant 127 : i32
    %64 = tpu.dynamic_rotate %33 by %c127_i32_10 dim 1 : vector<1x128xf32>, i32 -> vector<1x128xf32>
    %c127_i32_11 = arith.constant 127 : i32
    %65 = tpu.dynamic_rotate %37 by %c127_i32_11 dim 1 : vector<1x128xf32>, i32 -> vector<1x128xf32>
    %c127_i32_12 = arith.constant 127 : i32
    %66 = tpu.dynamic_rotate %43 by %c127_i32_12 dim 1 : vector<1x128xf32>, i32 -> vector<1x128xf32>
    %c127_i32_13 = arith.constant 127 : i32
    %67 = tpu.dynamic_rotate %47 by %c127_i32_13 dim 1 : vector<1x128xf32>, i32 -> vector<1x128xf32>
    %c127_i32_14 = arith.constant 127 : i32
    %68 = tpu.dynamic_rotate %51 by %c127_i32_14 dim 1 : vector<1x128xf32>, i32 -> vector<1x128xf32>
    %c127_i32_15 = arith.constant 127 : i32
    %69 = tpu.dynamic_rotate %55 by %c127_i32_15 dim 1 : vector<1x128xf32>, i32 -> vector<1x128xf32>
    %c127_i32_16 = arith.constant 127 : i32
    %70 = tpu.dynamic_rotate %61 by %c127_i32_16 dim 1 : vector<1x128xf32>, i32 -> vector<1x128xf32>
    %c0_17 = arith.constant 0 : index
    %c0_18 = arith.constant 0 : index
    %71 = vector.load %arg1[%c0_17, %c0_18] : memref<40x128xf32, #tpu.memory_space<vmem>>, vector<1x128xf32>
    %72 = arith.mulf %25, %71 : vector<1x128xf32>
    %c1_19 = arith.constant 1 : index
    %c0_20 = arith.constant 0 : index
    %73 = vector.load %arg1[%c1_19, %c0_20] : memref<40x128xf32, #tpu.memory_space<vmem>>, vector<1x128xf32>
    %74 = arith.mulf %29, %73 : vector<1x128xf32>
    %75 = arith.addf %72, %74 : vector<1x128xf32>
    %c2_21 = arith.constant 2 : index
    %c0_22 = arith.constant 0 : index
    %76 = vector.load %arg1[%c2_21, %c0_22] : memref<40x128xf32, #tpu.memory_space<vmem>>, vector<1x128xf32>
    %77 = arith.mulf %33, %76 : vector<1x128xf32>
    %78 = arith.addf %75, %77 : vector<1x128xf32>
    %c3_23 = arith.constant 3 : index
    %c0_24 = arith.constant 0 : index
    %79 = vector.load %arg1[%c3_23, %c0_24] : memref<40x128xf32, #tpu.memory_space<vmem>>, vector<1x128xf32>
    %80 = arith.mulf %37, %79 : vector<1x128xf32>
    %81 = arith.addf %78, %80 : vector<1x128xf32>
    %c4 = arith.constant 4 : index
    %c0_25 = arith.constant 0 : index
    %82 = vector.load %arg1[%c4, %c0_25] : memref<40x128xf32, #tpu.memory_space<vmem>>, vector<1x128xf32>
    %83 = arith.mulf %43, %82 : vector<1x128xf32>
    %84 = arith.addf %81, %83 : vector<1x128xf32>
    %c5 = arith.constant 5 : index
    %c0_26 = arith.constant 0 : index
    %85 = vector.load %arg1[%c5, %c0_26] : memref<40x128xf32, #tpu.memory_space<vmem>>, vector<1x128xf32>
    %86 = arith.mulf %47, %85 : vector<1x128xf32>
    %87 = arith.addf %84, %86 : vector<1x128xf32>
    %c6 = arith.constant 6 : index
    %c0_27 = arith.constant 0 : index
    %88 = vector.load %arg1[%c6, %c0_27] : memref<40x128xf32, #tpu.memory_space<vmem>>, vector<1x128xf32>
    %89 = arith.mulf %51, %88 : vector<1x128xf32>
    %90 = arith.addf %87, %89 : vector<1x128xf32>
    %c7 = arith.constant 7 : index
    %c0_28 = arith.constant 0 : index
    %91 = vector.load %arg1[%c7, %c0_28] : memref<40x128xf32, #tpu.memory_space<vmem>>, vector<1x128xf32>
    %92 = arith.mulf %55, %91 : vector<1x128xf32>
    %93 = arith.addf %90, %92 : vector<1x128xf32>
    %c8 = arith.constant 8 : index
    %c0_29 = arith.constant 0 : index
    %94 = vector.load %arg1[%c8, %c0_29] : memref<40x128xf32, #tpu.memory_space<vmem>>, vector<1x128xf32>
    %95 = arith.mulf %61, %94 : vector<1x128xf32>
    %96 = arith.addf %93, %95 : vector<1x128xf32>
    %97 = arith.mulf %62, %25 : vector<1x128xf32>
    %98 = arith.mulf %63, %29 : vector<1x128xf32>
    %99 = arith.addf %97, %98 : vector<1x128xf32>
    %100 = arith.mulf %64, %33 : vector<1x128xf32>
    %101 = arith.addf %99, %100 : vector<1x128xf32>
    %c16 = arith.constant 16 : index
    %c0_30 = arith.constant 0 : index
    %102 = vector.load %arg1[%c16, %c0_30] : memref<40x128xf32, #tpu.memory_space<vmem>>, vector<1x128xf32>
    %103 = arith.mulf %101, %102 : vector<1x128xf32>
    %104 = arith.mulf %62, %37 : vector<1x128xf32>
    %105 = arith.mulf %63, %43 : vector<1x128xf32>
    %106 = arith.addf %104, %105 : vector<1x128xf32>
    %107 = arith.mulf %64, %47 : vector<1x128xf32>
    %108 = arith.addf %106, %107 : vector<1x128xf32>
    %c17 = arith.constant 17 : index
    %c0_31 = arith.constant 0 : index
    %109 = vector.load %arg1[%c17, %c0_31] : memref<40x128xf32, #tpu.memory_space<vmem>>, vector<1x128xf32>
    %110 = arith.mulf %108, %109 : vector<1x128xf32>
    %111 = arith.addf %103, %110 : vector<1x128xf32>
    %112 = arith.mulf %62, %51 : vector<1x128xf32>
    %113 = arith.mulf %63, %55 : vector<1x128xf32>
    %114 = arith.addf %112, %113 : vector<1x128xf32>
    %115 = arith.mulf %64, %61 : vector<1x128xf32>
    %116 = arith.addf %114, %115 : vector<1x128xf32>
    %c18 = arith.constant 18 : index
    %c0_32 = arith.constant 0 : index
    %117 = vector.load %arg1[%c18, %c0_32] : memref<40x128xf32, #tpu.memory_space<vmem>>, vector<1x128xf32>
    %118 = arith.mulf %116, %117 : vector<1x128xf32>
    %119 = arith.addf %111, %118 : vector<1x128xf32>
    %120 = arith.mulf %65, %25 : vector<1x128xf32>
    %121 = arith.mulf %66, %29 : vector<1x128xf32>
    %122 = arith.addf %120, %121 : vector<1x128xf32>
    %123 = arith.mulf %67, %33 : vector<1x128xf32>
    %124 = arith.addf %122, %123 : vector<1x128xf32>
    %c19 = arith.constant 19 : index
    %c0_33 = arith.constant 0 : index
    %125 = vector.load %arg1[%c19, %c0_33] : memref<40x128xf32, #tpu.memory_space<vmem>>, vector<1x128xf32>
    %126 = arith.mulf %124, %125 : vector<1x128xf32>
    %127 = arith.addf %119, %126 : vector<1x128xf32>
    %128 = arith.mulf %65, %37 : vector<1x128xf32>
    %129 = arith.mulf %66, %43 : vector<1x128xf32>
    %130 = arith.addf %128, %129 : vector<1x128xf32>
    %131 = arith.mulf %67, %47 : vector<1x128xf32>
    %132 = arith.addf %130, %131 : vector<1x128xf32>
    %c20 = arith.constant 20 : index
    %c0_34 = arith.constant 0 : index
    %133 = vector.load %arg1[%c20, %c0_34] : memref<40x128xf32, #tpu.memory_space<vmem>>, vector<1x128xf32>
    %134 = arith.mulf %132, %133 : vector<1x128xf32>
    %135 = arith.addf %127, %134 : vector<1x128xf32>
    %136 = arith.mulf %65, %51 : vector<1x128xf32>
    %137 = arith.mulf %66, %55 : vector<1x128xf32>
    %138 = arith.addf %136, %137 : vector<1x128xf32>
    %139 = arith.mulf %67, %61 : vector<1x128xf32>
    %140 = arith.addf %138, %139 : vector<1x128xf32>
    %c21 = arith.constant 21 : index
    %c0_35 = arith.constant 0 : index
    %141 = vector.load %arg1[%c21, %c0_35] : memref<40x128xf32, #tpu.memory_space<vmem>>, vector<1x128xf32>
    %142 = arith.mulf %140, %141 : vector<1x128xf32>
    %143 = arith.addf %135, %142 : vector<1x128xf32>
    %144 = arith.mulf %68, %25 : vector<1x128xf32>
    %145 = arith.mulf %69, %29 : vector<1x128xf32>
    %146 = arith.addf %144, %145 : vector<1x128xf32>
    %147 = arith.mulf %70, %33 : vector<1x128xf32>
    %148 = arith.addf %146, %147 : vector<1x128xf32>
    %c22 = arith.constant 22 : index
    %c0_36 = arith.constant 0 : index
    %149 = vector.load %arg1[%c22, %c0_36] : memref<40x128xf32, #tpu.memory_space<vmem>>, vector<1x128xf32>
    %150 = arith.mulf %148, %149 : vector<1x128xf32>
    %151 = arith.addf %143, %150 : vector<1x128xf32>
    %152 = arith.mulf %68, %37 : vector<1x128xf32>
    %153 = arith.mulf %69, %43 : vector<1x128xf32>
    %154 = arith.addf %152, %153 : vector<1x128xf32>
    %155 = arith.mulf %70, %47 : vector<1x128xf32>
    %156 = arith.addf %154, %155 : vector<1x128xf32>
    %c23 = arith.constant 23 : index
    %c0_37 = arith.constant 0 : index
    %157 = vector.load %arg1[%c23, %c0_37] : memref<40x128xf32, #tpu.memory_space<vmem>>, vector<1x128xf32>
    %158 = arith.mulf %156, %157 : vector<1x128xf32>
    %159 = arith.addf %151, %158 : vector<1x128xf32>
    %160 = arith.mulf %68, %51 : vector<1x128xf32>
    %161 = arith.mulf %69, %55 : vector<1x128xf32>
    %162 = arith.addf %160, %161 : vector<1x128xf32>
    %163 = arith.mulf %70, %61 : vector<1x128xf32>
    %164 = arith.addf %162, %163 : vector<1x128xf32>
    %c24 = arith.constant 24 : index
    %c0_38 = arith.constant 0 : index
    %165 = vector.load %arg1[%c24, %c0_38] : memref<40x128xf32, #tpu.memory_space<vmem>>, vector<1x128xf32>
    %166 = arith.mulf %164, %165 : vector<1x128xf32>
    %167 = arith.addf %159, %166 : vector<1x128xf32>
    %168 = tpu.concatenate %96, %167 in 0 : vector<1x128xf32>, vector<1x128xf32> -> vector<2x128xf32>
    %c32 = arith.constant 32 : index
    %c0_39 = arith.constant 0 : index
    %169 = vector.load %arg1[%c32, %c0_39] : memref<40x128xf32, #tpu.memory_space<vmem>>, vector<2x128xf32>
    %cst_40 = arith.constant 1.000000e+00 : f32
    %170 = vector.broadcast %cst_40 : f32 to vector<2x128xf32>
    %171 = arith.subf %168, %170 : vector<2x128xf32>
    %cst_41 = arith.constant 5.000000e-01 : f32
    %172 = vector.broadcast %cst_41 : f32 to vector<2x128xf32>
    %173 = arith.mulf %171, %172 : vector<2x128xf32>
    %cst_42 = arith.constant -0.999899983 : f32
    %cst_43 = arith.constant 0.999899983 : f32
    %174 = vector.broadcast %cst_42 : f32 to vector<2x128xf32>
    %175 = arith.maximumf %174, %173 : vector<2x128xf32>
    %176 = vector.broadcast %cst_43 : f32 to vector<2x128xf32>
    %177 = arith.minimumf %176, %175 : vector<2x128xf32>
    %178 = math.absf %177 : vector<2x128xf32>
    %cst_44 = arith.constant -0.0012624911 : f32
    %179 = vector.broadcast %cst_44 : f32 to vector<2x128xf32>
    %180 = arith.mulf %179, %178 : vector<2x128xf32>
    %cst_45 = arith.constant 6.670090e-03 : f32
    %181 = vector.broadcast %cst_45 : f32 to vector<2x128xf32>
    %182 = arith.addf %180, %181 : vector<2x128xf32>
    %183 = arith.mulf %182, %178 : vector<2x128xf32>
    %cst_46 = arith.constant 0.0170881264 : f32
    %184 = vector.broadcast %cst_46 : f32 to vector<2x128xf32>
    %185 = arith.subf %183, %184 : vector<2x128xf32>
    %186 = arith.mulf %185, %178 : vector<2x128xf32>
    %cst_47 = arith.constant 0.0308918804 : f32
    %187 = vector.broadcast %cst_47 : f32 to vector<2x128xf32>
    %188 = arith.addf %186, %187 : vector<2x128xf32>
    %189 = arith.mulf %188, %178 : vector<2x128xf32>
    %cst_48 = arith.constant 0.0501743034 : f32
    %190 = vector.broadcast %cst_48 : f32 to vector<2x128xf32>
    %191 = arith.subf %189, %190 : vector<2x128xf32>
    %192 = arith.mulf %191, %178 : vector<2x128xf32>
    %cst_49 = arith.constant 0.0889789909 : f32
    %193 = vector.broadcast %cst_49 : f32 to vector<2x128xf32>
    %194 = arith.addf %192, %193 : vector<2x128xf32>
    %195 = arith.mulf %194, %178 : vector<2x128xf32>
    %cst_50 = arith.constant 0.214598805 : f32
    %196 = vector.broadcast %cst_50 : f32 to vector<2x128xf32>
    %197 = arith.subf %195, %196 : vector<2x128xf32>
    %198 = arith.mulf %197, %178 : vector<2x128xf32>
    %cst_51 = arith.constant 1.57079625 : f32
    %199 = vector.broadcast %cst_51 : f32 to vector<2x128xf32>
    %200 = arith.addf %198, %199 : vector<2x128xf32>
    %cst_52 = arith.constant 1.000000e+00 : f32
    %201 = vector.broadcast %cst_52 : f32 to vector<2x128xf32>
    %202 = arith.subf %201, %178 : vector<2x128xf32>
    %203 = math.sqrt %202 : vector<2x128xf32>
    %204 = arith.mulf %203, %200 : vector<2x128xf32>
    %cst_53 = arith.constant 0.000000e+00 : f32
    %205 = vector.broadcast %cst_53 : f32 to vector<2x128xf32>
    %206 = arith.cmpf olt, %177, %205 : vector<2x128xf32>
    %cst_54 = arith.constant 3.14159274 : f32
    %207 = vector.broadcast %cst_54 : f32 to vector<2x128xf32>
    %208 = arith.subf %207, %204 : vector<2x128xf32>
    %209 = arith.select %206, %208, %204 : vector<2x128xi1>, vector<2x128xf32>
    %210 = arith.mulf %209, %169 : vector<2x128xf32>
    %cst_55 = arith.constant dense<0.000000e+00> : vector<2xf32>
    %211 = vector.multi_reduction <add>, %210, %cst_55 [1] : vector<2x128xf32> to vector<2xf32>
    %212 = vector.shape_cast %211 : vector<2xf32> to vector<2x1xf32>
    %213 = vector.extract_strided_slice %212 {offsets = [0, 0], sizes = [1, 1], strides = [1, 1]} : vector<2x1xf32> to vector<1x1xf32>
    %cst_56 = arith.constant 0.333333343 : f32
    %214 = vector.broadcast %cst_56 : f32 to vector<1x1xf32>
    %215 = arith.mulf %214, %213 : vector<1x1xf32>
    %216 = vector.extract_strided_slice %212 {offsets = [1, 0], sizes = [1, 1], strides = [1, 1]} : vector<2x1xf32> to vector<1x1xf32>
    %cst_57 = arith.constant 0.142857149 : f32
    %217 = vector.broadcast %cst_57 : f32 to vector<1x1xf32>
    %218 = arith.mulf %217, %216 : vector<1x1xf32>
    %219 = arith.addf %215, %218 : vector<1x1xf32>
    %c0_58 = arith.constant 0 : index
    %c0_59 = arith.constant 0 : index
    %220 = vector.load %arg2[%c0_58, %c0_59] : memref<1x1xf32, #tpu.memory_space<vmem>>, vector<1x1xf32>
    tpu.vector_store %arg2[%c0_58, %c0_59], %219 {strides = array<i32>} : memref<1x1xf32, #tpu.memory_space<vmem>>, vector<1x1xf32>,
    return
  }
}

</mosaic_0001>

<llo_original>
// kernel: loss_fn.1
$region0: #{loss_fn.1}
  #allocation0 [shape = 'u32[]', space=smem, size = 0x4, offset = 0x4, fixed_abs, tag = 'smem constant byte address 0x4 - core index']
  #allocation1 [shape = 'u32[72,128]{1,0:T(1,128)}', space=vmem, size = 0x9000, scoped, tag = 'internal scratch']
  %s0 = inlined_call_operand.vmem [shape: f32[8,128], index: 0, kind: input, shape index: {}]
  %s1 = inlined_call_operand.hbm [shape: f32[40,128], index: 1, kind: input, shape index: {}]
  %s2 = inlined_call_operand.hbm [shape: f32[1,1], index: 2, kind: output, shape index: {}]
  %s3 = sld [smem:[#allocation0]]
  $region22: #{loss_fn.1} parent=0
    _
  %s5 = ssub.s32 1, %s3
  %s6 = scalar_select 0, %s5, %s3
  $region1: #{loss_fn.1} parent=0
    #allocation2 [shape = 'u8[20480]{0}', space=vmem, size = 0x5000, scoped, tag = 'input window, operand 1, single buffered']
    #allocation3 [shape = 's32[1]{0}', space=sflag, size = 0x4, scoped, tag = 'scoped memory for loss_fn.1']
    #allocation4 [shape = 's32[1]{0}', space=sflag, size = 0x4, scoped, tag = 'scoped memory for loss_fn.1']
    #allocation5 [shape = 'u8[512]{0}', space=vmem, size = 0x400, scoped, tag = 'output window, operand 0, single buffered']
    %7 = vsyncpa [#allocation3], 0
    %8 = vsyncpa [#allocation4], 0
    // Predicated region
    $region2: #{loss_fn.1} parent=1 // pred_check
      _
    $region3: #{loss_fn.1} parent=1 // pred_check_branch
      %10 = sbr.rel (0) target = $region5
    $region4: #{loss_fn.1} parent=1 // pred_region
      _
    $region5: #{loss_fn.1} parent=1 // pred_fallthru
      _
    // Predicated region
    $region6: #{loss_fn.1} parent=1 // pred_check
      _
    $region7: #{loss_fn.1} parent=1 // pred_check_branch
      %12 = sbr.rel (0) target = $region9
    $region8: #{loss_fn.1} parent=1 // pred_region
      %14 = vsyncadd [#allocation3], 0
      %s15 = sshll.u32 %s1, 4
      %s16 = int_to_ptr.hbm [resolvable:$true] %s15
      %s17 = sshll.u32 [#allocation2], 4
      %s18 = int_to_ptr.vmem [resolvable:$true] %s17
      %23 = dma.hbm_to_vmem [thread:$0]  %s16, 640, %s18, [#allocation3], 128, 128, 8
    $region9: #{loss_fn.1} parent=1 // pred_fallthru
      _
    // Predicated region
    $region10: #{loss_fn.1} parent=1 // pred_check
      _
    $region11: #{loss_fn.1} parent=1 // pred_check_branch
      %25 = sbr.rel (0) target = $region13
    $region12: #{loss_fn.1} parent=1 // pred_region
      %27 = dma.done [#allocation3], 640
    $region13: #{loss_fn.1} parent=1 // pred_fallthru
      _
    %v28 = vld [vmem:[%s0] sm:$0x1]
    %v29 = vld [vmem:[%s0 + $0x1] sm:$0x1]
    %v30 = vld [vmem:[%s0 + $0x2] sm:$0x1]
    %v31 = vld [vmem:[%s0 + $0x3] sm:$0x1]
    %v32 = vmul.f32 %v28, %v28
    %v33 = vmul.f32 %v29, %v29
    %v34 = vadd.f32 %v32, %v33
    %v35 = vmul.f32 %v30, %v30
    %v36 = vadd.f32 %v34, %v35
    %v37 = vmul.f32 %v31, %v31
    %v38 = vadd.f32 %v36, %v37
    %v39 = vmax.f32 %v38, 1e-12
    %v40 = vrcp.pop %v39
    %v41 = vmul.f32 %v39, %v40
    %v42 = vsub.f32 2.0, %v41
    %v43 = vmul.f32 %v40, %v42
    %v44 = vmul.f32 %v43, 2.0
    %v45 = vadd.f32 %v35, %v37
    %v46 = vmul.f32 %v44, %v45
    %v47 = vsub.f32 1.0, %v46
    %v48 = vmul.f32 %v29, %v30
    %v49 = vmul.f32 %v31, %v28
    %v50 = vsub.f32 %v48, %v49
    %v51 = vmul.f32 %v44, %v50
    %v52 = vmul.f32 %v29, %v31
    %v53 = vmul.f32 %v30, %v28
    %v54 = vadd.f32 %v52, %v53
    %v55 = vmul.f32 %v44, %v54
    %v56 = vadd.f32 %v48, %v49
    %v57 = vmul.f32 %v44, %v56
    %v58 = vadd.f32 %v33, %v37
    %v59 = vmul.f32 %v44, %v58
    %v60 = vsub.f32 1.0, %v59
    %v61 = vmul.f32 %v30, %v31
    %v62 = vmul.f32 %v29, %v28
    %v63 = vsub.f32 %v61, %v62
    %v64 = vmul.f32 %v44, %v63
    %v65 = vsub.f32 %v52, %v53
    %v66 = vmul.f32 %v44, %v65
    %v67 = vadd.f32 %v61, %v62
    %v68 = vmul.f32 %v44, %v67
    %v69 = vadd.f32 %v33, %v35
    %v70 = vmul.f32 %v44, %v69
    %v71 = vsub.f32 1.0, %v70
    %72 = vrot.lane.b32.xlu0 %v47, 127
    %v73 = vpop.permute.xlu0 %72
    %74 = vrot.lane.b32.xlu0 %v51, 127
    %v75 = vpop.permute.xlu0 %74
    %76 = vrot.lane.b32.xlu0 %v55, 127
    %v77 = vpop.permute.xlu0 %76
    %78 = vrot.lane.b32.xlu0 %v57, 127
    %v79 = vpop.permute.xlu0 %78
    %80 = vrot.lane.b32.xlu0 %v60, 127
    %v81 = vpop.permute.xlu0 %80
    %82 = vrot.lane.b32.xlu0 %v64, 127
    %v83 = vpop.permute.xlu0 %82
    %84 = vrot.lane.b32.xlu0 %v66, 127
    %v85 = vpop.permute.xlu0 %84
    %86 = vrot.lane.b32.xlu0 %v68, 127
    %v87 = vpop.permute.xlu0 %86
    %88 = vrot.lane.b32.xlu0 %v71, 127
    %v89 = vpop.permute.xlu0 %88
    %v90 = vld [vmem:[#allocation2] sm:$0x1]
    %v91 = vmul.f32 %v47, %v90
    %v92 = vld [vmem:[#allocation2 + $0x1] sm:$0x1]
    %v93 = vmul.f32 %v51, %v92
    %v94 = vadd.f32 %v91, %v93
    %v95 = vld [vmem:[#allocation2 + $0x2] sm:$0x1]
    %v96 = vmul.f32 %v55, %v95
    %v97 = vadd.f32 %v94, %v96
    %v98 = vld [vmem:[#allocation2 + $0x3] sm:$0x1]
    %v99 = vmul.f32 %v57, %v98
    %v100 = vadd.f32 %v97, %v99
    %v101 = vld [vmem:[#allocation2 + $0x4] sm:$0x1]
    %v102 = vmul.f32 %v60, %v101
    %v103 = vadd.f32 %v100, %v102
    %v104 = vld [vmem:[#allocation2 + $0x5] sm:$0x1]
    %v105 = vmul.f32 %v64, %v104
    %v106 = vadd.f32 %v103, %v105
    %v107 = vld [vmem:[#allocation2 + $0x6] sm:$0x1]
    %v108 = vmul.f32 %v66, %v107
    %v109 = vadd.f32 %v106, %v108
    %v110 = vld [vmem:[#allocation2 + $0x7] sm:$0x1]
    %v111 = vmul.f32 %v68, %v110
    %v112 = vadd.f32 %v109, %v111
    %v113 = vld [vmem:[#allocation2 + $0x8] sm:$0x1]
    %v114 = vmul.f32 %v71, %v113
    %v115 = vadd.f32 %v112, %v114
    %v116 = vmul.f32 %v73, %v47
    %v117 = vmul.f32 %v75, %v51
    %v118 = vadd.f32 %v116, %v117
    %v119 = vmul.f32 %v77, %v55
    %v120 = vadd.f32 %v118, %v119
    %v121 = vld [vmem:[#allocation2 + $0x10] sm:$0x1]
    %v122 = vmul.f32 %v120, %v121
    %v123 = vmul.f32 %v73, %v57
    %v124 = vmul.f32 %v75, %v60
    %v125 = vadd.f32 %v123, %v124
    %v126 = vmul.f32 %v77, %v64
    %v127 = vadd.f32 %v125, %v126
    %v128 = vld [vmem:[#allocation2 + $0x11] sm:$0x1]
    %v129 = vmul.f32 %v127, %v128
    %v130 = vadd.f32 %v122, %v129
    %v131 = vmul.f32 %v73, %v66
    %v132 = vmul.f32 %v75, %v68
    %v133 = vadd.f32 %v131, %v132
    %v134 = vmul.f32 %v77, %v71
    %v135 = vadd.f32 %v133, %v134
    %v136 = vld [vmem:[#allocation2 + $0x12] sm:$0x1]
    %v137 = vmul.f32 %v135, %v136
    %v138 = vadd.f32 %v130, %v137
    %v139 = vmul.f32 %v79, %v47
    %v140 = vmul.f32 %v81, %v51
    %v141 = vadd.f32 %v139, %v140
    %v142 = vmul.f32 %v83, %v55
    %v143 = vadd.f32 %v141, %v142
    %v144 = vld [vmem:[#allocation2 + $0x13] sm:$0x1]
    %v145 = vmul.f32 %v143, %v144
    %v146 = vadd.f32 %v138, %v145
    %v147 = vmul.f32 %v79, %v57
    %v148 = vmul.f32 %v81, %v60
    %v149 = vadd.f32 %v147, %v148
    %v150 = vmul.f32 %v83, %v64
    %v151 = vadd.f32 %v149, %v150
    %v152 = vld [vmem:[#allocation2 + $0x14] sm:$0x1]
    %v153 = vmul.f32 %v151, %v152
    %v154 = vadd.f32 %v146, %v153
    %v155 = vmul.f32 %v79, %v66
    %v156 = vmul.f32 %v81, %v68
    %v157 = vadd.f32 %v155, %v156
    %v158 = vmul.f32 %v83, %v71
    %v159 = vadd.f32 %v157, %v158
    %v160 = vld [vmem:[#allocation2 + $0x15] sm:$0x1]
    %v161 = vmul.f32 %v159, %v160
    %v162 = vadd.f32 %v154, %v161
    %v163 = vmul.f32 %v85, %v47
    %v164 = vmul.f32 %v87, %v51
    %v165 = vadd.f32 %v163, %v164
    %v166 = vmul.f32 %v89, %v55
    %v167 = vadd.f32 %v165, %v166
    %v168 = vld [vmem:[#allocation2 + $0x16] sm:$0x1]
    %v169 = vmul.f32 %v167, %v168
    %v170 = vadd.f32 %v162, %v169
    %v171 = vmul.f32 %v85, %v57
    %v172 = vmul.f32 %v87, %v60
    %v173 = vadd.f32 %v171, %v172
    %v174 = vmul.f32 %v89, %v64
    %v175 = vadd.f32 %v173, %v174
    %v176 = vld [vmem:[#allocation2 + $0x17] sm:$0x1]
    %v177 = vmul.f32 %v175, %v176
    %v178 = vadd.f32 %v170, %v177
    %v179 = vmul.f32 %v85, %v66
    %v180 = vmul.f32 %v87, %v68
    %v181 = vadd.f32 %v179, %v180
    %v182 = vmul.f32 %v89, %v71
    %v183 = vadd.f32 %v181, %v182
    %v184 = vld [vmem:[#allocation2 + $0x18] sm:$0x1]
    %v185 = vmul.f32 %v183, %v184
    %v186 = vadd.f32 %v178, %v185
    %v188 = vrot.slane %v186, 7
    %vm190 = vcmask 1040384
    %v191 = vsel %vm190, %v115, %v188
    %v192 = vld [vmem:[#allocation2 + $0x20] sm:$0x3]
    %v193 = vsub.f32 %v191, 1.0
    %v194 = vmul.f32 %v193, 0.5
    %v195 = vmax.f32 %v194, -0.9999
    %v196 = vmin.f32 %v195, 0.9999
    %v197 = vand.u32 2147483647, %v196
    %v198 = vmul.f32 %v197, -0.0012624911
    %v199 = vadd.f32 %v198, 0.00667009
    %v200 = vmul.f32 %v199, %v197
    %v201 = vsub.f32 %v200, 0.017088126
    %v202 = vmul.f32 %v201, %v197
    %v203 = vadd.f32 %v202, 0.03089188
    %v204 = vmul.f32 %v203, %v197
    %v205 = vsub.f32 %v204, 0.050174303
    %v206 = vmul.f32 %v205, %v197
    %v207 = vadd.f32 %v206, 0.08897899
    %v208 = vmul.f32 %v207, %v197
    %v209 = vsub.f32 %v208, 0.2145988
    %v210 = vmul.f32 %v209, %v197
    %v211 = vadd.f32 %v210, 1.5707963
    %v212 = vsub.f32 1.0, %v197
    %v213 = vrsqrt.pop %v212
    %v214 = vmul.f32 %v213, %v212
    %v215 = vmul.f32 %v214, %v213
    %v216 = vmul.f32 0.5, %v215
    %v217 = vsub.f32 1.5, %v216
    %v218 = vmul.f32 %v213, %v217
    %v219 = vmul.f32 %v212, %v218
    %vm220 = vcmp.eq.f32.partialorder %v212, inf
    %v221 = vsel %vm220, %v212, %v219
    %vm222 = vcmp.eq.f32.partialorder %v212, 0.0
    %v223 = vand.u32 %v212, 2147483648
    %v224 = vsel %vm222, %v223, %v221
    %v225 = vmul.f32 %v224, %v211
    %vm226 = vcmp.lt.f32.partialorder %v196, 0.0
    %v227 = vsub.f32 3.1415927, %v225
    %v228 = vsel %vm226, %v227, %v225
    %v229 = vmul.f32 %v228, %v192
    %vm230 = vcmask 1041408
    %v231 = vsel %vm230, %v229, 0.0
    %232 = vadd.xlane.f32.xlu0 %v231
    %v233 = vpop.xlane.xlu0 %232
    %v234 = vmul.f32 %v233, 0.33333334
    %v235 = vmul.f32 %v233, 0.14285715
    %v237 = vrot.slane %v235, 1
    %v239 = vadd.f32 %v234, %v237
    %vm240 = vcmask 0
    %241 = vst.msk [vmem:[#allocation5] sm:$0x1] %vm240, %v239
    // Predicated region
    $region14: #{loss_fn.1} parent=1 // pred_check
      _
    $region15: #{loss_fn.1} parent=1 // pred_check_branch
      %243 = sbr.rel (0) target = $region17
    $region16: #{loss_fn.1} parent=1 // pred_region
      %245 = vsyncadd [#allocation4], 0
      %s247 = sshll.u32 [#allocation5], 4
      %s248 = int_to_ptr.vmem [resolvable:$true] %s247
      %s249 = sshll.u32 %s2, 4
      %s250 = int_to_ptr.hbm [resolvable:$true] %s249
      %252 = dma.vmem_to_hbm [thread:$0]  %s248, 16, %s250, [#allocation4]
    $region17: #{loss_fn.1} parent=1 // pred_fallthru
      _
    // Predicated region
    $region18: #{loss_fn.1} parent=1 // pred_check
      _
    $region19: #{loss_fn.1} parent=1 // pred_check_branch
      %254 = sbr.rel (0) target = $region21
    $region20: #{loss_fn.1} parent=1 // pred_region
      %256 = dma.done [#allocation4], 16
    $region21: #{loss_fn.1} parent=1 // pred_fallthru
      _
    %257 = vsyncpa [#allocation3], 1
    %258 = vsyncpa [#allocation4], 1

</llo_original>
